<compile_context>
chip_gen: v6e
topology: v6e:2x2x1
jax: 0.10.0
libtpu: 0.0.40
codegen_flags: <defaults>
</compile_context>

<pallas_src>
from functools import partial

import jax
import jax.numpy as jnp
from jax.experimental import pallas as pl
from jax.experimental.pallas import tpu as pltpu


MIN_PALLAS_BYTES = 1 << 20  # below this a standalone pallas_call is overhead-bound


def _simple_loss_kernel(w_ref, p_ref, t_ref, o_ref):
    # w_ref: (1,) f32 scalar in SMEM; p/t/o: (tile_rows, lanes) VMEM tiles.
    diff = p_ref[...] - t_ref[...]                       # input dtype (VPU)
    o_ref[...] = (w_ref[0] * diff.astype(jnp.float32)).astype(o_ref.dtype)


def _round_up(x, m):
    return ((x + m - 1) // m) * m


def _choose_layout(total, dtype):
    """Pick (lanes, rows, tile_rows, num_tiles) for a lane-dense slab.

    Returns None when the element count cannot be laid out without padding
    (caller falls back to plain XLA).
    """
    itemsize = jnp.dtype(dtype).itemsize
    sub = 32 // itemsize            # sublane multiple: 8 f32, 16 bf16, 32 int8

    lanes = 128
    max_lanes = 2048
    # Widen lanes while the data stays divisible and at least `sub` full rows
    # of real data remain -> unmasked full-width stores.
    while (lanes * 2 <= max_lanes
           and total % (lanes * 2) == 0
           and total >= lanes * 2 * sub):
        lanes *= 2
    if total % lanes != 0:
        return None                 # ragged -> XLA fallback, no pad/slice passes

    rows = total // lanes

    # ~4 MiB per tile: 3 tensors x 2 pipeline buffers x 4 MiB = 24 MiB, inside
    # v6e/v7x's 32 MiB scoped default and under v7x's 64 MiB physical VMEM;
    # v5e gets an explicit vmem_limit below so it is not stuck at 16 MiB.
    target_tile_bytes = 4 * 1024 * 1024
    target_rows = max(sub, (target_tile_bytes // (lanes * itemsize)) // sub * sub)

    num_tiles = pl.cdiv(rows, target_rows)
    if num_tiles == 1 and rows >= 2 * sub:
        num_tiles = 2               # give v7x's two TensorCores work to split
    tile_rows = _round_up(pl.cdiv(rows, num_tiles), sub)
    num_tiles = pl.cdiv(rows, tile_rows)   # Pallas masks the partial edge tile
    return lanes, rows, tile_rows, num_tiles


@partial(jax.jit, static_argnames=("force_pallas",))
def simple_loss(predict, target, weight, *, force_pallas=False):
    """weight: shape (1,) learnable scalar (torch.nn.Parameter([1.0]))."""
    assert predict.shape == target.shape
    orig_shape = predict.shape
    in_dtype = predict.dtype
    itemsize = jnp.dtype(in_dtype).itemsize
    out_dtype = jnp.promote_types(weight.dtype, in_dtype)   # f32 param promotes

    total = predict.size
    layout = _choose_layout(total, in_dtype) if total > 0 else None
    too_small = (total * itemsize < MIN_PALLAS_BYTES) and not force_pallas

    if layout is None or too_small:
        # Ragged or overhead-bound sizes: let XLA fuse the elementwise op.
        return (weight[0] * (predict - target)).astype(out_dtype)

    lanes, rows, tile_rows, num_tiles = layout
    p2d = predict.reshape(rows, lanes)
    t2d = target.reshape(rows, lanes)
    w = weight.reshape(-1).astype(jnp.float32)               # 32-bit SMEM scalar

    tile_spec = pl.BlockSpec((tile_rows, lanes), lambda i: (i, 0))

    out2d = pl.pallas_call(
        _simple_loss_kernel,
        out_shape=jax.ShapeDtypeStruct((rows, lanes), out_dtype),
        grid=(num_tiles,),
        in_specs=[
            pl.BlockSpec(memory_space=pltpu.SMEM),   # scalar weight
            tile_spec,                               # predict tile
            tile_spec,                               # target tile
        ],
        out_specs=tile_spec,
        compiler_params=pltpu.CompilerParams(
            dimension_semantics=("parallel",),       # shards row-tiles across v7x TCs
            vmem_limit_bytes=32 * 1024 * 1024,
        ),
        cost_estimate=pl.CostEstimate(
            flops=2 * total,
            transcendentals=0,
            bytes_accessed=total * (2 * itemsize + jnp.dtype(out_dtype).itemsize),
        ),
    )(w, p2d, t2d)

    return out2d.reshape(orig_shape)


if __name__ == "__main__":
    key = jax.random.PRNGKey(0)
    k1, k2, k3, k4, k5, k6 = jax.random.split(key, 6)

    # Learnable scalar, matching torch.nn.Parameter(torch.Tensor([1])).
    weight = jnp.ones((1,), dtype=jnp.float32)

    # 1) NCHW-like shape through the Pallas path (forced past the small-input
    #    fallback so the kernel itself is exercised).
    shape = (2, 4, 16, 16)
    p = jax.random.normal(k1, shape, dtype=jnp.float32)
    t = jax.random.normal(k2, shape, dtype=jnp.float32)
    res = jax.block_until_ready(simple_loss(p, t, weight, force_pallas=True))
    ref = weight[0] * (p - t)
    assert res.shape == shape and res.dtype == ref.dtype
    assert jnp.allclose(res, ref, atol=1e-6, rtol=1e-6)

    # 2) Same shape through the default path (small-input XLA fallback).
    res_d = jax.block_until_ready(simple_loss(p, t, weight))
    assert jnp.allclose(res_d, ref, atol=1e-6, rtol=1e-6)

    # 3) bf16 inputs: f32 parameter promotes the result (PyTorch semantics);
    #    exercises the dtype-dependent sublane rounding.
    shape_bf = (4, 16, 16, 16)
    pb = jax.random.normal(k3, shape_bf, dtype=jnp.bfloat16)
    tb = jax.random.normal(k4, shape_bf, dtype=jnp.bfloat16)
    res_b = jax.block_until_ready(simple_loss(pb, tb, weight, force_pallas=True))
    ref_b = weight[0] * (pb - tb)
    assert res_b.dtype == jnp.float32
    assert jnp.allclose(res_b, ref_b, atol=1e-2, rtol=1e-2)

    # 4) Ragged shape (element count not a multiple of 128) -> clean XLA
    #    fallback, no pad / slice HBM passes.
    shape_r = (3, 5, 7)
    pr = jax.random.normal(k5, shape_r, dtype=jnp.float32)
    tr = jax.random.normal(k6, shape_r, dtype=jnp.float32)
    res_r = jax.block_until_ready(simple_loss(pr, tr, weight))
    ref_r = weight[0] * (pr - tr)
    assert res_r.shape == shape_r
    assert jnp.allclose(res_r, ref_r, atol=1e-6, rtol=1e-6)

    print("KERNEL_OK")
</pallas_src>

<mosaic_0001>
module attributes {stable_mosaic.version = 11 : i64} {
  func.func @_simple_loss_kernel(%arg0: i32, %arg1: memref<1xf32, #tpu.memory_space<smem>>, %arg2: memref<8x256xf32, #tpu.memory_space<vmem>>, %arg3: memref<8x256xf32, #tpu.memory_space<vmem>>, %arg4: memref<8x256xf32, #tpu.memory_space<vmem>>) attributes {dimension_semantics = [#tpu.dimension_semantics<parallel>], iteration_bounds = array<i64: 1>, scalar_prefetch = 0 : i64, scratch_operands = 0 : i64, tpu.core_type = #tpu.core_type<tc>, window_params = [{transform_indices = @transform_0, window_bounds = array<i64: 1>}, {transform_indices = @transform_1, window_bounds = array<i64: 8, 256>}, {transform_indices = @transform_2, window_bounds = array<i64: 8, 256>}, {transform_indices = @transform_3, window_bounds = array<i64: 8, 256>}]} {
    %c0 = arith.constant 0 : index
    %c0_0 = arith.constant 0 : index
    %0 = vector.load %arg2[%c0, %c0_0] : memref<8x256xf32, #tpu.memory_space<vmem>>, vector<8x256xf32>
    %c0_1 = arith.constant 0 : index
    %c0_2 = arith.constant 0 : index
    %1 = vector.load %arg3[%c0_1, %c0_2] : memref<8x256xf32, #tpu.memory_space<vmem>>, vector<8x256xf32>
    %2 = arith.subf %0, %1 : vector<8x256xf32>
    %c0_3 = arith.constant 0 : index
    %3 = memref.load %arg1[%c0_3] : memref<1xf32, #tpu.memory_space<smem>>
    %4 = vector.broadcast %3 : f32 to vector<8x256xf32>
    %5 = arith.mulf %4, %2 : vector<8x256xf32>
    %c0_4 = arith.constant 0 : index
    %c0_5 = arith.constant 0 : index
    %6 = vector.load %arg4[%c0_4, %c0_5] : memref<8x256xf32, #tpu.memory_space<vmem>>, vector<8x256xf32>
    tpu.vector_store %arg4[%c0_4, %c0_5], %5 {strides = array<i32>} : memref<8x256xf32, #tpu.memory_space<vmem>>, vector<8x256xf32>,
    return
  }
  func.func @transform_0(%arg0: i32) -> i32 {
    %c0_i32 = arith.constant 0 : i32
    %c0_i32_0 = arith.constant 0 : i32
    return %c0_i32 : i32
  }
  func.func @transform_1(%arg0: i32) -> (i32, i32) {
    %c0_i32 = arith.constant 0 : i32
    %c0_i32_0 = arith.constant 0 : i32
    return %arg0, %c0_i32 : i32, i32
  }
  func.func @transform_2(%arg0: i32) -> (i32, i32) {
    %c0_i32 = arith.constant 0 : i32
    %c0_i32_0 = arith.constant 0 : i32
    return %arg0, %c0_i32 : i32, i32
  }
  func.func @transform_3(%arg0: i32) -> (i32, i32) {
    %c0_i32 = arith.constant 0 : i32
    %c0_i32_0 = arith.constant 0 : i32
    return %arg0, %c0_i32 : i32, i32
  }
}

</mosaic_0001>

<llo_original>
// kernel: simple_loss.1
$region0: #{simple_loss.1}
  #allocation0 [shape = 'u32[]', space=smem, size = 0x4, offset = 0x4, fixed_abs, tag = 'smem constant byte address 0x4 - core index']
  #allocation1 [shape = 'u32[144,128]{1,0:T(1,128)}', space=vmem, size = 0x12000, scoped, tag = 'internal scratch']
  #allocation2 [shape = 'f32[1]{0:T(128)S(6)}', space=smem, size = 0x200, scoped, tag = 'scoped memory for simple_loss.1']
  %s0 = inlined_call_operand.<no memory space> [shape: f32[1], index: 0, kind: input, shape index: {}]
  %s1 = inlined_call_operand.vmem [shape: f32[8,256], index: 1, kind: input, shape index: {}]
  %s2 = inlined_call_operand.vmem [shape: f32[8,256], index: 2, kind: input, shape index: {}]
  %s3 = inlined_call_operand.vmem [shape: f32[8,256], index: 3, kind: output, shape index: {}]
  %s4 = sld [smem:[#allocation0]]
  $region22: #{simple_loss.1} parent=0
    _
  %s6 = ssub.s32 1, %s4
  %s7 = scalar_select 0, %s6, %s4
  %8 = sst [smem:[#allocation2]] %s0
  // Predicated region
  $region2: #{simple_loss.1} parent=0 // pred_check
    _
  $region3: #{simple_loss.1} parent=0 // pred_check_branch
    %10 = sbr.rel (0) target = $region5
  $region4: #{simple_loss.1} parent=0 // pred_region
    _
  $region5: #{simple_loss.1} parent=0 // pred_fallthru
    _
  // Predicated region
  $region6: #{simple_loss.1} parent=0 // pred_check
    _
  $region7: #{simple_loss.1} parent=0 // pred_check_branch
    %12 = sbr.rel (0) target = $region9
  $region8: #{simple_loss.1} parent=0 // pred_region
    _
  $region9: #{simple_loss.1} parent=0 // pred_fallthru
    _
  // Predicated region
  $region10: #{simple_loss.1} parent=0 // pred_check
    _
  $region11: #{simple_loss.1} parent=0 // pred_check_branch
    %14 = sbr.rel (0) target = $region13
  $region12: #{simple_loss.1} parent=0 // pred_region
    _
  $region13: #{simple_loss.1} parent=0 // pred_fallthru
    _
  %v15 = vld [vmem:[%s1] sm:$0xff]
  %v16 = vld [vmem:[%s1 + $0x8] sm:$0xff]
  %v17 = vld [vmem:[%s2] sm:$0xff]
  %v18 = vld [vmem:[%s2 + $0x8] sm:$0xff]
  %v19 = vsub.f32 %v15, %v17
  %v20 = vsub.f32 %v16, %v18
  %s21 = sld [smem:[#allocation2]]
  %v22 = vstv %s21
  %v23 = vmul.f32 %v22, %v19
  %v24 = vmul.f32 %v22, %v20
  %25 = vst [vmem:[%s3] sm:$0xff] %v23
  %26 = vst [vmem:[%s3 + $0x8] sm:$0xff] %v24
  // Predicated region
  $region14: #{simple_loss.1} parent=0 // pred_check
    _
  $region15: #{simple_loss.1} parent=0 // pred_check_branch
    %28 = sbr.rel (0) target = $region17
  $region16: #{simple_loss.1} parent=0 // pred_region
    _
  $region17: #{simple_loss.1} parent=0 // pred_fallthru
    _
  // Predicated region
  $region18: #{simple_loss.1} parent=0 // pred_check
    _
  $region19: #{simple_loss.1} parent=0 // pred_check_branch
    %30 = sbr.rel (0) target = $region21
  $region20: #{simple_loss.1} parent=0 // pred_region
    _
  $region21: #{simple_loss.1} parent=0 // pred_fallthru
    _

</llo_original>
